<compile_context>
chip_gen: v7x
topology: tpu7x:2x2x1
jax: 0.10.0
libtpu: 0.0.40
codegen_flags: <defaults>
</compile_context>

<pallas_src>
import functools

import jax
import jax.numpy as jnp
from jax import lax
from jax.experimental import pallas as pl
from jax.experimental.pallas import tpu as pltpu

LANE = 128
SUB = 8                      # sublanes per f32 vreg
STREAM_TILE_ROWS = 2048      # 2048 x 128 x 4B = 1 MiB per f32 input block
RESIDENT_MAX_ROWS = 8192     # <= 4 MiB per f32 slab -> fused single-call path
CHUNK_ROWS = 512             # in-kernel chunking for the fused resident path


# ---------------------------------------------------------------------------
# Fused resident kernel: both slabs live in VMEM; two in-kernel passes over the
# same resident data (single HBM read), final scalar loss written to SMEM.
# ---------------------------------------------------------------------------
def _fused_kernel(p_ref, t_ref, o_ref, *, total_n, rows):
    starts = list(range(0, rows, CHUNK_ROWS))
    ragged = (rows * LANE) != total_n

    def chunk_mask(start, size):
        # Valid-element mask for chunk [start, start+size); only the final
        # chunk of a ragged slab needs one.
        if (not ragged) or (start + size < rows):
            return None
        row = lax.broadcasted_iota(jnp.int32, (size, LANE), 0)
        col = lax.broadcasted_iota(jnp.int32, (size, LANE), 1)
        return (start + row) * LANE + col < total_n

    # ---- pass 1: hc-independent reductions (max, sum|d|, #valid) -----------
    mx = jnp.float32(-jnp.inf)
    s1 = jnp.float32(0.0)
    n1 = jnp.float32(0.0)
    for start in starts:
        size = min(CHUNK_ROWS, rows - start)
        p = p_ref[start:start + size, :].astype(jnp.float32)
        t = t_ref[start:start + size, :].astype(jnp.float32)
        diff = p - t
        valid = t > 0
        m = chunk_mask(start, size)
        if m is not None:
            diff_for_max = jnp.where(m, diff, -jnp.inf)
            valid = jnp.logical_and(valid, m)
        else:
            diff_for_max = diff
        d = jnp.where(valid, jnp.abs(diff), 0.0)
        mx = jnp.maximum(mx, jnp.max(diff_for_max))
        s1 = s1 + jnp.sum(d)
        n1 = n1 + jnp.sum(valid.astype(jnp.float32))

    hc = jnp.float32(0.2) * mx

    # ---- pass 2: huber-conditioned sum of squares / count ------------------
    s2 = jnp.float32(0.0)
    n2 = jnp.float32(0.0)
    for start in starts:
        size = min(CHUNK_ROWS, rows - start)
        p = p_ref[start:start + size, :].astype(jnp.float32)
        t = t_ref[start:start + size, :].astype(jnp.float32)
        valid = t > 0
        m = chunk_mask(start, size)
        if m is not None:
            valid = jnp.logical_and(valid, m)
        d = jnp.where(valid, jnp.abs(t - p), 0.0)
        huber = jnp.logical_and(valid, d > hc)
        s2 = s2 + jnp.sum(jnp.where(huber, d * d, 0.0))
        n2 = n2 + jnp.sum(huber.astype(jnp.float32))

    # mean(cat(d, d2)) == (sum d + sum d2) / (#valid + #huber).
    # NaN when no valid element exists -- matches the PyTorch reference (0/0).
    o_ref[0, 0] = (s1 + s2) / (n1 + n2)


# ---------------------------------------------------------------------------
# Streaming pass 1 (large inputs): over all elements
#   out[0,0] = max(pred - target); out[0,1] = sum_{valid}|t-p|; out[0,2] = #valid
# ---------------------------------------------------------------------------
def _pass1_kernel(p_ref, t_ref, o_ref, max_acc, sum_acc, cnt_acc, *,
                  total_n, rows, tile_rows, need_mask, lane_exact):
    i = pl.program_id(0)
    nsteps = pl.num_programs(0)

    @pl.when(i == 0)
    def _init():
        max_acc[...] = jnp.full_like(max_acc, -jnp.inf)
        sum_acc[...] = jnp.zeros_like(sum_acc)
        cnt_acc[...] = jnp.zeros_like(cnt_acc)

    p = p_ref[...].astype(jnp.float32)
    t = t_ref[...].astype(jnp.float32)
    diff = p - t
    absd = jnp.abs(diff)          # |t - p| == |p - t|; reuse the subtraction

    def _accumulate(max_src, d, valid_f):
        # (tile_rows,128) -> (tile_rows//8, 8, 128); axis-0 reduce is pure VPU
        # work, so each single-vreg accumulator costs one load + one store.
        m3 = max_src.reshape(tile_rows // SUB, SUB, LANE)
        d3 = d.reshape(tile_rows // SUB, SUB, LANE)
        c3 = valid_f.reshape(tile_rows // SUB, SUB, LANE)
        max_acc[...] = jnp.maximum(max_acc[...], jnp.max(m3, axis=0))
        sum_acc[...] = sum_acc[...] + jnp.sum(d3, axis=0)
        cnt_acc[...] = cnt_acc[...] + jnp.sum(c3, axis=0)

    def _fast_body():             # fully in-bounds block (no mask work)
        valid = t > 0
        _accumulate(diff, jnp.where(valid, absd, 0.0),
                    valid.astype(jnp.float32))

    def _masked_body():           # last block: padded lanes / OOB rows
        row = lax.broadcasted_iota(jnp.int32, (tile_rows, LANE), 0)
        grow = i * tile_rows + row
        if lane_exact:
            in_b = grow < rows
        else:
            col = lax.broadcasted_iota(jnp.int32, (tile_rows, LANE), 1)
            in_b = grow * LANE + col < total_n
        valid = jnp.logical_and(t > 0, in_b)
        _accumulate(jnp.where(in_b, diff, -jnp.inf),
                    jnp.where(valid, absd, 0.0),
                    valid.astype(jnp.float32))

    if need_mask:
        pl.when(i < nsteps - 1)(_fast_body)
        pl.when(i == nsteps - 1)(_masked_body)
    else:
        _fast_body()

    @pl.when(i == nsteps - 1)
    def _finalize():
        o_ref[0, 0] = jnp.max(max_acc[...])
        o_ref[0, 1] = jnp.sum(sum_acc[...])
        o_ref[0, 2] = jnp.sum(cnt_acc[...])


# ---------------------------------------------------------------------------
# Streaming pass 2: given stats from pass 1 (hc = 0.2 * stats[0,0])
#   out[0,0] = sum_{valid & |t-p|>hc} |t-p|^2 ; out[0,1] = #{valid & |t-p|>hc}
# ---------------------------------------------------------------------------
def _pass2_kernel(stats_ref, p_ref, t_ref, o_ref, sum2_acc, cnt2_acc, *,
                  total_n, rows, tile_rows, need_mask, lane_exact):
    i = pl.program_id(0)
    nsteps = pl.num_programs(0)

    @pl.when(i == 0)
    def _init():
        sum2_acc[...] = jnp.zeros_like(sum2_acc)
        cnt2_acc[...] = jnp.zeros_like(cnt2_acc)

    hc = jnp.float32(0.2) * stats_ref[0, 0]

    p = p_ref[...].astype(jnp.float32)
    t = t_ref[...].astype(jnp.float32)
    absd = jnp.abs(p - t)

    def _accumulate(valid):
        d = jnp.where(valid, absd, 0.0)
        huber = jnp.logical_and(valid, d > hc)
        sq3 = jnp.where(huber, d * d, 0.0).reshape(tile_rows // SUB, SUB, LANE)
        h3 = huber.astype(jnp.float32).reshape(tile_rows // SUB, SUB, LANE)
        sum2_acc[...] = sum2_acc[...] + jnp.sum(sq3, axis=0)
        cnt2_acc[...] = cnt2_acc[...] + jnp.sum(h3, axis=0)

    def _fast_body():
        _accumulate(t > 0)

    def _masked_body():
        row = lax.broadcasted_iota(jnp.int32, (tile_rows, LANE), 0)
        grow = i * tile_rows + row
        if lane_exact:
            in_b = grow < rows
        else:
            col = lax.broadcasted_iota(jnp.int32, (tile_rows, LANE), 1)
            in_b = grow * LANE + col < total_n
        _accumulate(jnp.logical_and(t > 0, in_b))

    if need_mask:
        pl.when(i < nsteps - 1)(_fast_body)
        pl.when(i == nsteps - 1)(_masked_body)
    else:
        _fast_body()

    @pl.when(i == nsteps - 1)
    def _finalize():
        o_ref[0, 0] = jnp.sum(sum2_acc[...])
        o_ref[0, 1] = jnp.sum(cnt2_acc[...])


# ---------------------------------------------------------------------------
# Glue
# ---------------------------------------------------------------------------
def _flatten_to_slab(x, wire_dtype):
    """Flatten to (rows, 128). No copy when n % 128 == 0 and dtype matches."""
    flat = x.reshape(-1).astype(wire_dtype)
    n = flat.shape[0]
    rows = pl.cdiv(n, LANE)
    if rows * LANE != n:
        # Rare ragged case: minimal zero-pad so the reshape is possible; the
        # padded lanes are masked in-kernel.
        flat = jnp.pad(flat, (0, rows * LANE - n))
    return flat.reshape(rows, LANE), n


def _berhu_fused(p2, t2, n, rows):
    out = pl.pallas_call(
        functools.partial(_fused_kernel, total_n=n, rows=rows),
        out_shape=jax.ShapeDtypeStruct((1, 1), jnp.float32),
        grid_spec=pltpu.PrefetchScalarGridSpec(
            num_scalar_prefetch=0,
            grid=(1,),
            in_specs=[pl.BlockSpec((rows, LANE), lambda i: (0, 0)),
                      pl.BlockSpec((rows, LANE), lambda i: (0, 0))],
            out_specs=pl.BlockSpec(memory_space=pltpu.MemorySpace.SMEM),
        ),
        compiler_params=pltpu.CompilerParams(
            dimension_semantics=("arbitrary",),
            vmem_limit_bytes=32 * 1024 * 1024,   # safe on v7x's 64 MiB VMEM too
        ),
    )(p2, t2)
    return out[0, 0]


def _berhu_streaming(p2, t2, n, rows):
    tile_rows = STREAM_TILE_ROWS
    grid_n = pl.cdiv(rows, tile_rows)
    need_mask = (grid_n * tile_rows * LANE) != n
    lane_exact = (n % LANE) == 0

    row_spec = pl.BlockSpec((tile_rows, LANE), lambda i: (i, 0))
    smem_spec = pl.BlockSpec(memory_space=pltpu.MemorySpace.SMEM)
    cparams = pltpu.CompilerParams(
        dimension_semantics=("arbitrary",),
        vmem_limit_bytes=32 * 1024 * 1024,
    )
    kw = dict(total_n=n, rows=rows, tile_rows=tile_rows,
              need_mask=need_mask, lane_exact=lane_exact)

    stats = pl.pallas_call(
        functools.partial(_pass1_kernel, **kw),
        out_shape=jax.ShapeDtypeStruct((1, 3), jnp.float32),
        grid_spec=pltpu.PrefetchScalarGridSpec(
            num_scalar_prefetch=0,
            grid=(grid_n,),
            in_specs=[row_spec, row_spec],
            out_specs=smem_spec,
            scratch_shapes=[pltpu.VMEM((SUB, LANE), jnp.float32)] * 3,
        ),
        compiler_params=cparams,
    )(p2, t2)

    sums2 = pl.pallas_call(
        functools.partial(_pass2_kernel, **kw),
        out_shape=jax.ShapeDtypeStruct((1, 2), jnp.float32),
        grid_spec=pltpu.PrefetchScalarGridSpec(
            num_scalar_prefetch=0,
            grid=(grid_n,),
            in_specs=[smem_spec, row_spec, row_spec],
            out_specs=smem_spec,
            scratch_shapes=[pltpu.VMEM((SUB, LANE), jnp.float32)] * 2,
        ),
        compiler_params=cparams,
    )(stats, p2, t2)

    # mean(cat(diff, diff2)) == (sum(diff) + sum(diff2)) / (|diff| + |diff2|)
    return (stats[0, 1] + sums2[0, 0]) / (stats[0, 2] + sums2[0, 1])


@jax.jit
def berhu_loss(pred, target):
    assert pred.ndim == target.ndim, "inconsistent dimensions"
    assert pred.shape == target.shape, "pred/target shape mismatch"

    # Keep bf16/f32 on the wire (no HBM-doubling host upcast); everything else
    # is cast to f32 host-side. In-kernel compute is always f32.
    wire_dt = jnp.promote_types(pred.dtype, target.dtype)
    if wire_dt not in (jnp.dtype(jnp.float32), jnp.dtype(jnp.bfloat16)):
        wire_dt = jnp.dtype(jnp.float32)

    p2, n = _flatten_to_slab(pred, wire_dt)
    t2, _ = _flatten_to_slab(target, wire_dt)
    rows = p2.shape[0]

    if rows <= RESIDENT_MAX_ROWS:
        return _berhu_fused(p2, t2, n, rows)
    return _berhu_streaming(p2, t2, n, rows)


# ---------------------------------------------------------------------------
# Reference + tests
# ---------------------------------------------------------------------------
def _ref_berhu(pred, target):
    """Plain-JAX reference mirroring the PyTorch forward."""
    hc = 0.2 * jnp.max(pred - target)
    valid = target > 0
    d = jnp.where(valid, jnp.abs(target - pred), 0.0)
    huber = jnp.logical_and(valid, d > hc)
    s1 = jnp.sum(d)
    s2 = jnp.sum(jnp.where(huber, d * d, 0.0))
    cnt = jnp.sum(valid.astype(jnp.float32)) + jnp.sum(huber.astype(jnp.float32))
    return (s1 + s2) / cnt


def _make_inputs(key, shape):
    k1, k2, k3 = jax.random.split(key, 3)
    pred = jax.random.normal(k1, shape, dtype=jnp.float32)
    depth = jnp.abs(jax.random.normal(k2, shape, dtype=jnp.float32)) + 0.1
    holes = jax.random.uniform(k3, shape) < 0.3
    target = jnp.where(holes, 0.0, depth).astype(jnp.float32)
    return pred, target


if __name__ == "__main__":
    key = jax.random.PRNGKey(0)
    keys = jax.random.split(key, 4)

    cases = [
        ((2, 4, 16, 16), "fused / lane-exact", 1e-5, 1e-6),          # primary
        ((2, 4, 15, 17), "fused / ragged tail", 1e-5, 1e-6),
        ((3, 8, 200, 172), "streaming / lane-exact last block", 1e-4, 1e-6),
        ((3, 8, 200, 173), "streaming / ragged tail", 1e-4, 1e-6),
    ]
    for k, (shape, name, rtol, atol) in zip(keys, cases):
        pred, target = _make_inputs(k, shape)
        loss = berhu_loss(pred, target)
        jax.block_until_ready(loss)
        ref = _ref_berhu(pred, target)
        assert jnp.isfinite(loss), f"non-finite loss ({name})"
        assert jnp.allclose(loss, ref, rtol=rtol, atol=atol), (name, loss, ref)

    print("KERNEL_OK")
</pallas_src>

<mosaic_0001>
module attributes {stable_mosaic.version = 11 : i64} {
  func.func @_fused_kernel(%arg0: i32, %arg1: memref<16x128xf32, #tpu.memory_space<vmem>>, %arg2: memref<16x128xf32, #tpu.memory_space<vmem>>, %arg3: memref<1x1xf32, #tpu.memory_space<smem>>) attributes {dimension_semantics = [#tpu.dimension_semantics<arbitrary>], iteration_bounds = array<i64: 1>, scalar_prefetch = 0 : i64, scratch_operands = 0 : i64, tpu.core_type = #tpu.core_type<tc>, window_params = [{pipeline_mode = #tpu.pipeline_mode<synchronous>, transform_indices = @transform_0, window_bounds = array<i64: 16, 128>}, {pipeline_mode = #tpu.pipeline_mode<synchronous>, transform_indices = @transform_1, window_bounds = array<i64: 16, 128>}, {transform_indices = @transform_2, window_bounds = array<i64: 1, 1>}]} {
    %c0 = arith.constant 0 : index
    %c0_0 = arith.constant 0 : index
    %0 = vector.load %arg1[%c0, %c0_0] : memref<16x128xf32, #tpu.memory_space<vmem>>, vector<16x128xf32>
    %c0_1 = arith.constant 0 : index
    %c0_2 = arith.constant 0 : index
    %1 = vector.load %arg2[%c0_1, %c0_2] : memref<16x128xf32, #tpu.memory_space<vmem>>, vector<16x128xf32>
    %2 = arith.subf %0, %1 : vector<16x128xf32>
    %cst = arith.constant 0.000000e+00 : f32
    %3 = vector.broadcast %cst : f32 to vector<16x128xf32>
    %4 = arith.cmpf ogt, %1, %3 : vector<16x128xf32>
    %5 = math.absf %2 : vector<16x128xf32>
    %cst_3 = arith.constant 0.000000e+00 : f32
    %6 = vector.broadcast %cst_3 : f32 to vector<16x128xf32>
    %7 = arith.select %4, %5, %6 : vector<16x128xi1>, vector<16x128xf32>
    %8 = vector.shape_cast %2 : vector<16x128xf32> to vector<1x16x128xf32>
    %cst_4 = arith.constant dense<0xFF800000> : vector<1xf32>
    %9 = vector.multi_reduction <maximumf>, %8, %cst_4 [1, 2] : vector<1x16x128xf32> to vector<1xf32>
    %10 = vector.shape_cast %9 : vector<1xf32> to vector<1x1x1xf32>
    %11 = vector.extract %10[0, 0, 0] : f32 from vector<1x1x1xf32>
    %cst_5 = arith.constant 0xFF800000 : f32
    %12 = arith.maximumf %cst_5, %11 : f32
    %13 = vector.shape_cast %7 : vector<16x128xf32> to vector<1x16x128xf32>
    %cst_6 = arith.constant dense<0.000000e+00> : vector<1xf32>
    %14 = vector.multi_reduction <add>, %13, %cst_6 [1, 2] : vector<1x16x128xf32> to vector<1xf32>
    %15 = vector.shape_cast %14 : vector<1xf32> to vector<1x1x1xf32>
    %16 = vector.extract %15[0, 0, 0] : f32 from vector<1x1x1xf32>
    %cst_7 = arith.constant 0.000000e+00 : f32
    %17 = arith.addf %cst_7, %16 : f32
    %18 = arith.extui %4 : vector<16x128xi1> to vector<16x128xi32>
    %19 = arith.sitofp %18 : vector<16x128xi32> to vector<16x128xf32>
    %20 = vector.shape_cast %19 : vector<16x128xf32> to vector<1x16x128xf32>
    %cst_8 = arith.constant dense<0.000000e+00> : vector<1xf32>
    %21 = vector.multi_reduction <add>, %20, %cst_8 [1, 2] : vector<1x16x128xf32> to vector<1xf32>
    %22 = vector.shape_cast %21 : vector<1xf32> to vector<1x1x1xf32>
    %23 = vector.extract %22[0, 0, 0] : f32 from vector<1x1x1xf32>
    %cst_9 = arith.constant 0.000000e+00 : f32
    %24 = arith.addf %cst_9, %23 : f32
    %cst_10 = arith.constant 2.000000e-01 : f32
    %25 = arith.mulf %cst_10, %12 : f32
    %c0_11 = arith.constant 0 : index
    %c0_12 = arith.constant 0 : index
    %26 = vector.load %arg1[%c0_11, %c0_12] : memref<16x128xf32, #tpu.memory_space<vmem>>, vector<16x128xf32>
    %c0_13 = arith.constant 0 : index
    %c0_14 = arith.constant 0 : index
    %27 = vector.load %arg2[%c0_13, %c0_14] : memref<16x128xf32, #tpu.memory_space<vmem>>, vector<16x128xf32>
    %cst_15 = arith.constant 0.000000e+00 : f32
    %28 = vector.broadcast %cst_15 : f32 to vector<16x128xf32>
    %29 = arith.cmpf ogt, %27, %28 : vector<16x128xf32>
    %30 = arith.subf %27, %26 : vector<16x128xf32>
    %31 = math.absf %30 : vector<16x128xf32>
    %cst_16 = arith.constant 0.000000e+00 : f32
    %32 = vector.broadcast %cst_16 : f32 to vector<16x128xf32>
    %33 = arith.select %29, %31, %32 : vector<16x128xi1>, vector<16x128xf32>
    %34 = vector.broadcast %25 : f32 to vector<16x128xf32>
    %35 = arith.cmpf ogt, %33, %34 : vector<16x128xf32>
    %36 = arith.andi %29, %35 : vector<16x128xi1>
    %37 = arith.mulf %33, %33 : vector<16x128xf32>
    %cst_17 = arith.constant 0.000000e+00 : f32
    %38 = vector.broadcast %cst_17 : f32 to vector<16x128xf32>
    %39 = arith.select %36, %37, %38 : vector<16x128xi1>, vector<16x128xf32>
    %40 = vector.shape_cast %39 : vector<16x128xf32> to vector<1x16x128xf32>
    %cst_18 = arith.constant dense<0.000000e+00> : vector<1xf32>
    %41 = vector.multi_reduction <add>, %40, %cst_18 [1, 2] : vector<1x16x128xf32> to vector<1xf32>
    %42 = vector.shape_cast %41 : vector<1xf32> to vector<1x1x1xf32>
    %43 = vector.extract %42[0, 0, 0] : f32 from vector<1x1x1xf32>
    %cst_19 = arith.constant 0.000000e+00 : f32
    %44 = arith.addf %cst_19, %43 : f32
    %45 = arith.extui %36 : vector<16x128xi1> to vector<16x128xi32>
    %46 = arith.sitofp %45 : vector<16x128xi32> to vector<16x128xf32>
    %47 = vector.shape_cast %46 : vector<16x128xf32> to vector<1x16x128xf32>
    %cst_20 = arith.constant dense<0.000000e+00> : vector<1xf32>
    %48 = vector.multi_reduction <add>, %47, %cst_20 [1, 2] : vector<1x16x128xf32> to vector<1xf32>
    %49 = vector.shape_cast %48 : vector<1xf32> to vector<1x1x1xf32>
    %50 = vector.extract %49[0, 0, 0] : f32 from vector<1x1x1xf32>
    %cst_21 = arith.constant 0.000000e+00 : f32
    %51 = arith.addf %cst_21, %50 : f32
    %52 = arith.addf %17, %44 : f32
    %53 = arith.addf %24, %51 : f32
    %54 = arith.divf %52, %53 : f32
    %c0_22 = arith.constant 0 : index
    %c0_23 = arith.constant 0 : index
    %55 = memref.load %arg3[%c0_22, %c0_23] : memref<1x1xf32, #tpu.memory_space<smem>>
    memref.store %54, %arg3[%c0_22, %c0_23] : memref<1x1xf32, #tpu.memory_space<smem>>
    return
  }
  func.func @transform_0(%arg0: i32) -> (i32, i32) {
    %c0_i32 = arith.constant 0 : i32
    %c0_i32_0 = arith.constant 0 : i32
    %c0_i32_1 = arith.constant 0 : i32
    return %c0_i32, %c0_i32_0 : i32, i32
  }
  func.func @transform_1(%arg0: i32) -> (i32, i32) {
    %c0_i32 = arith.constant 0 : i32
    %c0_i32_0 = arith.constant 0 : i32
    %c0_i32_1 = arith.constant 0 : i32
    return %c0_i32, %c0_i32_0 : i32, i32
  }
  func.func @transform_2(%arg0: i32) -> (i32, i32) {
    %c0_i32 = arith.constant 0 : i32
    %c0_i32_0 = arith.constant 0 : i32
    %c0_i32_1 = arith.constant 0 : i32
    return %c0_i32, %c0_i32_0 : i32, i32
  }
}

</mosaic_0001>

<llo_original>
// kernel: berhu_loss.1
$region0: #{berhu_loss.1}
  #allocation0 [shape = 'u32[]', space=smem, size = 0x4, offset = 0x4, fixed_abs, tag = 'smem constant byte address 0x4 - core index']
  #allocation1 [shape = 'u32[144,128]{1,0:T(1,128)}', space=vmem, size = 0x12000, scoped, tag = 'internal scratch']
  %s0 = inlined_call_operand.vmem [shape: f32[16,128], index: 0, kind: input, shape index: {}]
  %s1 = inlined_call_operand.vmem [shape: f32[16,128], index: 1, kind: input, shape index: {}]
  %s2 = inlined_call_operand.hbm [shape: f32[1,1], index: 2, kind: output, shape index: {}]
  %s3 = sld [smem:[#allocation0]]
  $region18: #{berhu_loss.1} parent=0
    _
  %s5 = ssub.s32 1, %s3
  %s6 = scalar_select 0, %s5, %s3
  $region1: #{berhu_loss.1} parent=0
    #allocation2 [shape = 'u8[512]{0}', space=smem, size = 0x200, scoped, tag = 'output window, operand 0, single buffered']
    #allocation3 [shape = 's32[1]{0}', space=sflag, size = 0x4, scoped, tag = 'scoped memory for berhu_loss.1']
    %7 = vsyncpa [#allocation3], 0
    // Predicated region
    $region2: #{berhu_loss.1} parent=1 // pred_check
      _
    $region3: #{berhu_loss.1} parent=1 // pred_check_branch
      %9 = sbr.rel (0) target = $region5
    $region4: #{berhu_loss.1} parent=1 // pred_region
      _
    $region5: #{berhu_loss.1} parent=1 // pred_fallthru
      _
    // Predicated region
    $region6: #{berhu_loss.1} parent=1 // pred_check
      _
    $region7: #{berhu_loss.1} parent=1 // pred_check_branch
      %11 = sbr.rel (0) target = $region9
    $region8: #{berhu_loss.1} parent=1 // pred_region
      _
    $region9: #{berhu_loss.1} parent=1 // pred_fallthru
      _
    %v12 = vld [vmem:[%s0] sm:$0xff]
    %v13 = vld [vmem:[%s0 + $0x8] sm:$0xff]
    %v14 = vld [vmem:[%s1] sm:$0xff]
    %v15 = vld [vmem:[%s1 + $0x8] sm:$0xff]
    %v16 = vsub.f32 %v12, %v14
    %v17 = vsub.f32 %v13, %v15
    %vm18 = vcmp.gt.f32.partialorder %v14, 0.0
    %vm19 = vcmp.gt.f32.partialorder %v15, 0.0
    %v20 = vand.u32 2147483647, %v16
    %v21 = vand.u32 2147483647, %v17
    %v22 = vsel %vm18, %v20, 0.0
    %v23 = vsel %vm19, %v21, 0.0
    %v24 = vmax.f32 %v16, %v17
    %25 = vmax.xlane.f32.xlu0 %v24
    %v26 = vpop.xlane.xlu0 %25
    %v27 = vrot.slane %v26, 4
    %v28 = vmax.f32 %v26, %v27
    %v29 = vrot.slane %v28, 2
    %v30 = vmax.f32 %v28, %v29
    %v31 = vrot.slane %v30, 1
    %v32 = vmax.f32 %v30, %v31
    %s33 = vtos %v32
    %v34 = vadd.f32 %v22, %v23
    %35 = vadd.xlane.f32.xlu0 %v34
    %v36 = vpop.xlane.xlu0 %35
    %v37 = vrot.slane %v36, 4
    %v38 = vadd.f32 %v36, %v37
    %v39 = vrot.slane %v38, 2
    %v40 = vadd.f32 %v38, %v39
    %v41 = vrot.slane %v40, 1
    %v42 = vadd.f32 %v40, %v41
    %s43 = vtos %v42
    %s44 = sadd.f32 %s43, 0.0
    %v45 = vsel %vm18, 1, 0
    %v46 = vsel %vm19, 1, 0
    %v47 = vcvt.s32.f32 %v45
    %v48 = vcvt.s32.f32 %v46
    %v49 = vadd.f32 %v47, %v48
    %50 = vadd.xlane.f32.xlu0 %v49
    %v51 = vpop.xlane.xlu0 %50
    %v52 = vrot.slane %v51, 4
    %v53 = vadd.f32 %v51, %v52
    %v54 = vrot.slane %v53, 2
    %v55 = vadd.f32 %v53, %v54
    %v56 = vrot.slane %v55, 1
    %v57 = vadd.f32 %v55, %v56
    %s58 = vtos %v57
    %s59 = sadd.f32 %s58, 0.0
    %s60 = smul.f32 %s33, 0.2
    %v61 = vsub.f32 %v14, %v12
    %v62 = vsub.f32 %v15, %v13
    %v63 = vand.u32 2147483647, %v61
    %v64 = vand.u32 2147483647, %v62
    %v65 = vsel %vm18, %v63, 0.0
    %v66 = vsel %vm19, %v64, 0.0
    %v67 = vstv %s60
    %vm68 = vcmp.gt.f32.partialorder %v65, %v67
    %vm69 = vcmp.gt.f32.partialorder %v66, %v67
    %vm70 = vmand %vm18, %vm68
    %vm71 = vmand %vm19, %vm69
    %v72 = vmul.f32 %v65, %v65
    %v73 = vmul.f32 %v66, %v66
    %v74 = vsel %vm70, %v72, 0.0
    %v75 = vsel %vm71, %v73, 0.0
    %v76 = vadd.f32 %v74, %v75
    %77 = vadd.xlane.f32.xlu0 %v76
    %v78 = vpop.xlane.xlu0 %77
    %v79 = vrot.slane %v78, 4
    %v80 = vadd.f32 %v78, %v79
    %v81 = vrot.slane %v80, 2
    %v82 = vadd.f32 %v80, %v81
    %v83 = vrot.slane %v82, 1
    %v84 = vadd.f32 %v82, %v83
    %s85 = vtos %v84
    %s86 = sadd.f32 %s85, 0.0
    %v87 = vsel %vm70, 1, 0
    %v88 = vsel %vm71, 1, 0
    %v89 = vcvt.s32.f32 %v87
    %v90 = vcvt.s32.f32 %v88
    %v91 = vadd.f32 %v89, %v90
    %92 = vadd.xlane.f32.xlu0 %v91
    %v93 = vpop.xlane.xlu0 %92
    %v94 = vrot.slane %v93, 4
    %v95 = vadd.f32 %v93, %v94
    %v96 = vrot.slane %v95, 2
    %v97 = vadd.f32 %v95, %v96
    %v98 = vrot.slane %v97, 1
    %v99 = vadd.f32 %v97, %v98
    %s100 = vtos %v99
    %s101 = sadd.f32 %s100, 0.0
    %s102 = sadd.f32 %s44, %s86
    %s103 = sadd.f32 %s59, %s101
    %v104 = vstv %s103
    %v105 = vrcp.pop %v104
    %s106 = vtos %v105
    %s107 = smul.f32 %s102, %s106
    %s108 = scalar_lea.smem [#allocation2], 0
    %109 = sst [smem:[%s108]] %s107
    // Predicated region
    $region10: #{berhu_loss.1} parent=1 // pred_check
      _
    $region11: #{berhu_loss.1} parent=1 // pred_check_branch
      %111 = sbr.rel (0) target = $region13
    $region12: #{berhu_loss.1} parent=1 // pred_region
      %s113 = ssub.s32 16, 16
      %114 = vsyncadd [#allocation3], %s113
      %117 = dma.smem_to_hbm [#allocation2], 16, %s2, [#allocation3]
    $region13: #{berhu_loss.1} parent=1 // pred_fallthru
      _
    // Predicated region
    $region14: #{berhu_loss.1} parent=1 // pred_check
      _
    $region15: #{berhu_loss.1} parent=1 // pred_check_branch
      %119 = sbr.rel (0) target = $region17
    $region16: #{berhu_loss.1} parent=1 // pred_region
      %120 = dma.done [#allocation3], 16
    $region17: #{berhu_loss.1} parent=1 // pred_fallthru
      _
    %121 = sfence
    %122 = vsyncpa [#allocation3], 1

</llo_original>
